<compile_context>
chip_gen: v7x
topology: tpu7x:2x2x1
jax: 0.10.0
libtpu: 0.0.40
codegen_flags: <defaults>
</compile_context>

<pallas_src>
import functools

import jax
import jax.numpy as jnp
from jax import lax
from jax.experimental import pallas as pl
from jax.experimental.pallas import tpu as pltpu

_MIB = 1024 * 1024


def _round_up(x: int, m: int) -> int:
    return ((x + m - 1) // m) * m


def _largest_dividing_tile(aligned_dim: int, align: int, cap: int) -> int:
    """Largest multiple of `align` that divides `aligned_dim` and is <= cap."""
    best = align
    t = align
    upper = min(cap, aligned_dim)
    while t <= upper:
        if aligned_dim % t == 0:
            best = t
        t += align
    return best


def _choose_weight_tile(dim: int, cap: int):
    """Pick (tile, padded_dim) for a weight dimension.

    Prefer a tile that divides the 128-aligned dim so the (potentially huge)
    weight never needs an extra HBM pad copy; only pad past 128-alignment when
    the best dividing tile would be pathologically small."""
    aligned = _round_up(dim, 128)
    if aligned <= cap:
        return aligned, aligned
    t = _largest_dividing_tile(aligned, 128, cap)
    if t >= min(cap, 512):
        return t, aligned
    # Dividing tile would be tiny -> accept one pad copy to keep tiles large.
    return cap, _round_up(dim, cap)


def _tpu_config():
    """Generation-aware tile caps and scoped-VMEM limit."""
    try:
        kind = jax.devices()[0].device_kind.lower()
    except Exception:  # pragma: no cover - defensive
        kind = ""
    if "v7" in kind:
        # 64 MiB physical VMEM, 2 TensorCores per chip.
        return dict(vmem_limit=48 * _MIB, cap_b=512, cap_n=2048, cap_k=1024, two_tc=True)
    if "v4" in kind or "v5" in kind or "v6" in kind:
        # 128 MiB physical VMEM (v5e scoped default is only 16 MiB -> raise it).
        return dict(vmem_limit=96 * _MIB, cap_b=512, cap_n=2048, cap_k=2048, two_tc=False)
    # Unknown device: conservative (fits 64 MiB VMEM).
    return dict(vmem_limit=48 * _MIB, cap_b=512, cap_n=2048, cap_k=1024, two_tc=True)


def _output_head_kernel(x_ref, w_ref, b_ref, o_ref, acc_ref, *,
                        apply_sigmoid: bool, x_resident: bool):
    # x_ref: (KT, tb, tk) if x_resident (whole K resident, one DMA per batch
    #        tile) else (tb, tk).
    # w_ref: (tn, tk)  b_ref: (1, tn)  o_ref: (tb, tn)
    # acc_ref: (tb, tn) f32 accumulator, resident across the K grid axis.
    k = pl.program_id(2)

    @pl.when(k == 0)
    def _():
        acc_ref[...] = jnp.zeros_like(acc_ref)

    # Leading-axis dynamic index selects the (tb, tk) K-chunk with no relayout.
    x_tile = x_ref[k] if x_resident else x_ref[...]

    # trans_b matmul: contract x dim 1 with w dim 1; native-dtype operands on
    # the MXU with f32 accumulation (no in-kernel weight transpose).
    acc_ref[...] += lax.dot_general(
        x_tile,
        w_ref[...],
        dimension_numbers=(((1,), (1,)), ((), ())),
        preferred_element_type=jnp.float32,
    )

    @pl.when(k == pl.num_programs(2) - 1)
    def _():
        out = acc_ref[...] + b_ref[...].astype(jnp.float32)
        if apply_sigmoid:
            # exp + reciprocal both run on the EUP slot -> nearly free next to MXU.
            out = pl.reciprocal(1.0 + jnp.exp(-out), approx=True)
        o_ref[...] = out.astype(o_ref.dtype)


def output_head(x, weight, bias, return_logits=True, compute_dtype=None):
    """x: (B, n_in); weight: (n_out, n_in); bias: (n_out,).  Matches nn.Linear.

    compute_dtype: optionally stream x/weight in a narrower dtype (e.g. bf16);
    accumulation stays f32.  Default None keeps the caller's dtype exactly.
    """
    B, n_in = x.shape
    n_out = weight.shape[0]
    out_dtype = x.dtype

    if compute_dtype is not None:
        x = x.astype(compute_dtype)
        weight = weight.astype(compute_dtype)

    cfg = _tpu_config()

    # --- tile selection -----------------------------------------------------
    x_isize = jnp.dtype(x.dtype).itemsize
    w_isize = jnp.dtype(weight.dtype).itemsize
    o_isize = jnp.dtype(out_dtype).itemsize

    # Batch tile: round to the dtype's sublane packing (8 f32 / 16 bf16 / 32 i8).
    sublane = 8 * max(1, 4 // x_isize)
    tb = min(_round_up(B, sublane), cfg["cap_b"])
    Bp = _round_up(B, tb)

    # Weight tiles: avoid padding the weight in HBM whenever possible.
    tn, Np = _choose_weight_tile(n_out, cfg["cap_n"])
    tk, Kp = _choose_weight_tile(n_in, cfg["cap_k"])

    # On 2-TC chips, make sure the parallel grid axes expose >= 2 iterations.
    if cfg["two_tc"] and (Bp // tb) * (Np // tn) == 1 and Np // 128 >= 2:
        tn = _largest_dividing_tile(Np, 128, Np // 2)

    # --- decide whether x can stay K-resident in VMEM ------------------------
    base_vmem = (2 * tn * tk * w_isize          # W double-buffered
                 + 2 * tb * tn * o_isize        # output double-buffered
                 + tb * tn * 4                  # f32 accumulator
                 + 2 * tn * x_isize)            # bias (negligible)
    x_resident = base_vmem + 2 * tb * Kp * x_isize + 8 * _MIB <= cfg["vmem_limit"]

    # --- padding (x/bias are cheap to pad; weight only if unavoidable) -------
    xp = x if (Bp == B and Kp == n_in) else jnp.pad(x, ((0, Bp - B), (0, Kp - n_in)))
    wp = weight if (Np == n_out and Kp == n_in) else jnp.pad(
        weight, ((0, Np - n_out), (0, Kp - n_in)))
    bp = (bias if Np == n_out else jnp.pad(bias, (0, Np - n_out))).reshape(1, Np)

    KT = Kp // tk
    grid = (Bp // tb, Np // tn, KT)

    if x_resident:
        # Lay x out as (K/tk, Bp, tk): the whole K extent for a batch tile is
        # one rectangular DMA, and the per-step chunk is a leading-axis index.
        x_arg = xp.reshape(Bp, KT, tk).transpose(1, 0, 2)
        x_spec = pl.BlockSpec((KT, tb, tk), lambda i, j, k: (0, i, 0))
    else:
        x_arg = xp
        x_spec = pl.BlockSpec((tb, tk), lambda i, j, k: (i, k))

    kernel = functools.partial(
        _output_head_kernel,
        apply_sigmoid=not return_logits,
        x_resident=x_resident,
    )

    # Cost estimate reflecting actual HBM traffic (x / W re-stream factors).
    x_passes = 1 if x_resident else (Np // tn)
    w_passes = Bp // tb
    cost = pl.CostEstimate(
        flops=2 * Bp * Kp * Np,
        transcendentals=0 if return_logits else Bp * Np,
        bytes_accessed=(Bp * Kp * x_isize * x_passes
                        + Np * Kp * w_isize * w_passes
                        + Np * w_isize
                        + Bp * Np * o_isize),
    )

    out_padded = pl.pallas_call(
        kernel,
        out_shape=jax.ShapeDtypeStruct((Bp, Np), out_dtype),
        grid_spec=pltpu.PrefetchScalarGridSpec(
            num_scalar_prefetch=0,
            grid=grid,
            in_specs=[
                x_spec,                                            # activations
                pl.BlockSpec((tn, tk), lambda i, j, k: (j, k)),    # W tile (trans_b)
                pl.BlockSpec((1, tn), lambda i, j, k: (0, j)),     # bias tile
            ],
            out_specs=pl.BlockSpec((tb, tn), lambda i, j, k: (i, j)),
            scratch_shapes=[pltpu.VMEM((tb, tn), jnp.float32)],
        ),
        compiler_params=pltpu.CompilerParams(
            # batch / n_out tiles independent -> shard across TCs; K reduces.
            dimension_semantics=("parallel", "parallel", "arbitrary"),
            vmem_limit_bytes=cfg["vmem_limit"],
        ),
        cost_estimate=cost,
    )(x_arg, wp, bp)

    return out_padded[:B, :n_out]


def _init_linear_params(key, n_in, n_out, dtype=jnp.float32):
    # Deterministic init mimicking nn.Linear default: U(-1/sqrt(n_in), 1/sqrt(n_in))
    kw, kb = jax.random.split(key)
    bound = 1.0 / jnp.sqrt(jnp.float32(n_in))
    weight = jax.random.uniform(kw, (n_out, n_in), dtype, -bound, bound)
    bias = jax.random.uniform(kb, (n_out,), dtype, -bound, bound)
    return weight, bias


if __name__ == "__main__":
    key = jax.random.PRNGKey(0)
    k_x, k_p = jax.random.split(key)

    batch, n_in, n_out = 8, 32, 16
    x = jax.random.normal(k_x, (batch, n_in), dtype=jnp.float32)
    weight, bias = _init_linear_params(k_p, n_in, n_out)

    # logits path (return_logits=True, the default)
    logits = output_head(x, weight, bias, return_logits=True)
    # activation path (return_logits=False -> sigmoid)
    probs = output_head(x, weight, bias, return_logits=False)

    jax.block_until_ready(logits)
    jax.block_until_ready(probs)

    # sanity check against plain JAX reference
    ref_logits = x @ weight.T + bias
    ref_probs = jax.nn.sigmoid(ref_logits)
    assert jnp.allclose(logits, ref_logits, atol=1e-4, rtol=1e-4), "logits mismatch"
    # approx reciprocal (EUP vrcp) -> slightly looser tolerance on the sigmoid path
    assert jnp.allclose(probs, ref_probs, atol=2e-3, rtol=2e-3), "probs mismatch"

    print("KERNEL_OK")
</pallas_src>

<mosaic_0001>
module attributes {stable_mosaic.version = 11 : i64} {
  func.func @_output_head_kernel(%arg0: i32, %arg1: i32, %arg2: i32, %arg3: memref<1x8x128xf32, #tpu.memory_space<vmem>>, %arg4: memref<128x128xf32, #tpu.memory_space<vmem>>, %arg5: memref<1x128xf32, #tpu.memory_space<vmem>>, %arg6: memref<8x128xf32, #tpu.memory_space<vmem>>, %arg7: memref<8x128xf32, #tpu.memory_space<vmem>>) attributes {dimension_semantics = [#tpu.dimension_semantics<parallel>, #tpu.dimension_semantics<parallel>, #tpu.dimension_semantics<arbitrary>], iteration_bounds = array<i64: 1, 1, 1>, scalar_prefetch = 0 : i64, scratch_operands = 1 : i64, tpu.core_type = #tpu.core_type<tc>, window_params = [{transform_indices = @transform_0, window_bounds = array<i64: 1, 8, 128>}, {transform_indices = @transform_1, window_bounds = array<i64: 128, 128>}, {transform_indices = @transform_2, window_bounds = array<i64: 1, 128>}, {transform_indices = @transform_3, window_bounds = array<i64: 8, 128>}]} {
    %c0_i32 = arith.constant 0 : i32
    %0 = arith.cmpi eq, %arg2, %c0_i32 : i32
    %1 = arith.extui %0 : i1 to i32
    %c0_i32_0 = arith.constant 0 : i32
    %2 = arith.cmpi ne, %1, %c0_i32_0 : i32
    scf.if %2 {
      %cst_10 = arith.constant 0.000000e+00 : f32
      %14 = vector.broadcast %cst_10 : f32 to vector<8x128xf32>
      %c0_11 = arith.constant 0 : index
      %c0_12 = arith.constant 0 : index
      %15 = vector.load %arg7[%c0_11, %c0_12] : memref<8x128xf32, #tpu.memory_space<vmem>>, vector<8x128xf32>
      tpu.vector_store %arg7[%c0_11, %c0_12], %14 {strides = array<i32>} : memref<8x128xf32, #tpu.memory_space<vmem>>, vector<8x128xf32>,
    } else {
    }
    %3 = arith.index_cast %arg2 : i32 to index
    %c0 = arith.constant 0 : index
    %c0_1 = arith.constant 0 : index
    %4 = vector.load %arg3[%3, %c0, %c0_1] : memref<1x8x128xf32, #tpu.memory_space<vmem>>, vector<1x8x128xf32>
    %5 = vector.shape_cast %4 : vector<1x8x128xf32> to vector<8x128xf32>
    %c0_2 = arith.constant 0 : index
    %c0_3 = arith.constant 0 : index
    %6 = vector.load %arg7[%c0_2, %c0_3] : memref<8x128xf32, #tpu.memory_space<vmem>>, vector<8x128xf32>
    %c0_4 = arith.constant 0 : index
    %c0_5 = arith.constant 0 : index
    %7 = vector.load %arg4[%c0_4, %c0_5] : memref<128x128xf32, #tpu.memory_space<vmem>>, vector<128x128xf32>
    %cst = arith.constant dense<0.000000e+00> : vector<8x128xf32>
    %8 = tpu.matmul %5, %7, %cst {dimension_numbers = #tpu.dot_dimension_numbers<[1], [1], [0], [0], [0, 0, 1, 0], [], []>} : vector<8x128xf32>, vector<128x128xf32>, vector<8x128xf32> -> vector<8x128xf32>
    %9 = arith.addf %6, %8 : vector<8x128xf32>
    %c0_6 = arith.constant 0 : index
    %c0_7 = arith.constant 0 : index
    %10 = vector.load %arg7[%c0_6, %c0_7] : memref<8x128xf32, #tpu.memory_space<vmem>>, vector<8x128xf32>
    tpu.vector_store %arg7[%c0_6, %c0_7], %9 {strides = array<i32>} : memref<8x128xf32, #tpu.memory_space<vmem>>, vector<8x128xf32>,
    %c0_i32_8 = arith.constant 0 : i32
    %11 = arith.cmpi eq, %arg2, %c0_i32_8 : i32
    %12 = arith.extui %11 : i1 to i32
    %c0_i32_9 = arith.constant 0 : i32
    %13 = arith.cmpi ne, %12, %c0_i32_9 : i32
    scf.if %13 {
      %c0_10 = arith.constant 0 : index
      %c0_11 = arith.constant 0 : index
      %14 = vector.load %arg7[%c0_10, %c0_11] : memref<8x128xf32, #tpu.memory_space<vmem>>, vector<8x128xf32>
      %c0_12 = arith.constant 0 : index
      %c0_13 = arith.constant 0 : index
      %15 = vector.load %arg5[%c0_12, %c0_13] : memref<1x128xf32, #tpu.memory_space<vmem>>, vector<1x128xf32>
      %16 = vector.broadcast %15 : vector<1x128xf32> to vector<8x128xf32>
      %17 = arith.addf %14, %16 : vector<8x128xf32>
      %c0_14 = arith.constant 0 : index
      %c0_15 = arith.constant 0 : index
      %18 = vector.load %arg6[%c0_14, %c0_15] : memref<8x128xf32, #tpu.memory_space<vmem>>, vector<8x128xf32>
      tpu.vector_store %arg6[%c0_14, %c0_15], %17 {strides = array<i32>} : memref<8x128xf32, #tpu.memory_space<vmem>>, vector<8x128xf32>,
    } else {
    }
    return
  }
  func.func @transform_0(%arg0: i32, %arg1: i32, %arg2: i32) -> (i32, i32, i32) {
    %c0_i32 = arith.constant 0 : i32
    %c0_i32_0 = arith.constant 0 : i32
    %c0_i32_1 = arith.constant 0 : i32
    return %c0_i32, %arg0, %c0_i32_0 : i32, i32, i32
  }
  func.func @transform_1(%arg0: i32, %arg1: i32, %arg2: i32) -> (i32, i32) {
    %c0_i32 = arith.constant 0 : i32
    return %arg1, %arg2 : i32, i32
  }
  func.func @transform_2(%arg0: i32, %arg1: i32, %arg2: i32) -> (i32, i32) {
    %c0_i32 = arith.constant 0 : i32
    %c0_i32_0 = arith.constant 0 : i32
    return %c0_i32, %arg1 : i32, i32
  }
  func.func @transform_3(%arg0: i32, %arg1: i32, %arg2: i32) -> (i32, i32) {
    %c0_i32 = arith.constant 0 : i32
    return %arg0, %arg1 : i32, i32
  }
}

</mosaic_0001>

<llo_original>
// kernel: tpu_custom_call.1
$region0: #{tpu_custom_call.1}
  #allocation0 [shape = 'u32[]', space=smem, size = 0x4, offset = 0x4, fixed_abs, tag = 'smem constant byte address 0x4 - core index']
  #allocation1 [shape = 'u32[144,128]{1,0:T(1,128)}', space=vmem, size = 0x12000, scoped, tag = 'internal scratch']
  #allocation2 [shape = 'f32[8,128]{1,0:T(8,128)}', space=vmem, size = 0x1000, scoped, tag = 'scratch operand']
  %s0 = inlined_call_operand.hbm [shape: f32[1,8,128], index: 0, kind: input, shape index: {}]
  %s1 = inlined_call_operand.hbm [shape: f32[128,128], index: 1, kind: input, shape index: {}]
  %s2 = inlined_call_operand.vmem [shape: f32[1,128], index: 2, kind: input, shape index: {}]
  %s3 = inlined_call_operand.hbm [shape: f32[8,128], index: 3, kind: output, shape index: {}]
  %s4 = sld [smem:[#allocation0]]
  $region38: #{tpu_custom_call.1} parent=0
    _
  %s6 = ssub.s32 1, %s4
  %s7 = scalar_select 0, %s6, %s4
  $region1: #{tpu_custom_call.1} parent=0
    #allocation3 [shape = 'u8[4096]{0}', space=vmem, size = 0x1000, scoped, tag = 'input window, operand 0, single buffered']
    #allocation4 [shape = 's32[1]{0}', space=sflag, size = 0x4, scoped, tag = 'scoped memory for tpu_custom_call.1']
    #allocation5 [shape = 's32[1]{0}', space=sflag, size = 0x4, scoped, tag = 'scoped memory for tpu_custom_call.1']
    #allocation6 [shape = 'u8[65536]{0}', space=vmem, size = 0x10000, scoped, tag = 'input window, operand 1, single buffered']
    #allocation7 [shape = 's32[1]{0}', space=sflag, size = 0x4, scoped, tag = 'scoped memory for tpu_custom_call.1']
    #allocation8 [shape = 'u8[4096]{0}', space=vmem, size = 0x1000, scoped, tag = 'output window, operand 0, single buffered']
    %8 = vsyncpa [#allocation4], 0
    %9 = vsyncpa [#allocation7], 0
    %10 = vsyncpa [#allocation5], 0
    // Predicated region
    $region2: #{tpu_custom_call.1} parent=1 // pred_check
      _
    $region3: #{tpu_custom_call.1} parent=1 // pred_check_branch
      %12 = sbr.rel (0) target = $region5
    $region4: #{tpu_custom_call.1} parent=1 // pred_region
      %s14 = ssub.s32 128, 128
      %15 = vsyncadd [#allocation4], %s14
      %s17 = sshll.u32 [#allocation3], 4
      %s18 = int_to_ptr.vmem [resolvable:$true] %s17
      %20 = dma.hbm_to_vmem [thread:$0]  %s0, 128, %s18, [#allocation4]
    $region5: #{tpu_custom_call.1} parent=1 // pred_fallthru
      _
    // Predicated region
    $region6: #{tpu_custom_call.1} parent=1 // pred_check
      _
    $region7: #{tpu_custom_call.1} parent=1 // pred_check_branch
      %22 = sbr.rel (0) target = $region9
    $region8: #{tpu_custom_call.1} parent=1 // pred_region
      %s24 = ssub.s32 2048, 2048
      %25 = vsyncadd [#allocation7], %s24
      %s26 = sshll.u32 [#allocation6], 4
      %s27 = int_to_ptr.vmem [resolvable:$true] %s26
      %32 = dma.hbm_to_vmem [thread:$0]  %s1, 2048, %s27, [#allocation7], 128, 128, 8
    $region9: #{tpu_custom_call.1} parent=1 // pred_fallthru
      _
    // Predicated region
    $region10: #{tpu_custom_call.1} parent=1 // pred_check
      _
    $region11: #{tpu_custom_call.1} parent=1 // pred_check_branch
      %34 = sbr.rel (0) target = $region13
    $region12: #{tpu_custom_call.1} parent=1 // pred_region
      _
    $region13: #{tpu_custom_call.1} parent=1 // pred_fallthru
      _
    // Predicated region
    $region14: #{tpu_custom_call.1} parent=1 // pred_check
      _
    $region15: #{tpu_custom_call.1} parent=1 // pred_check_branch
      %36 = sbr.rel (0) target = $region17
    $region16: #{tpu_custom_call.1} parent=1 // pred_region
      %37 = dma.done [#allocation4], 128
    $region17: #{tpu_custom_call.1} parent=1 // pred_fallthru
      _
    // Predicated region
    $region18: #{tpu_custom_call.1} parent=1 // pred_check
      _
    $region19: #{tpu_custom_call.1} parent=1 // pred_check_branch
      %39 = sbr.rel (0) target = $region21
    $region20: #{tpu_custom_call.1} parent=1 // pred_region
      %40 = dma.done [#allocation7], 2048
    $region21: #{tpu_custom_call.1} parent=1 // pred_fallthru
      _
    %p41 = scmp.eq.s32.totalorder 0, 0
    // Predicated region
    $region22: #{tpu_custom_call.1} parent=1 // pred_check
      %p42 = pneg %p41
    $region23: #{tpu_custom_call.1} parent=1 // pred_check_branch
      %44 = sbr.rel (%p42) target = $region25
    $region24: #{tpu_custom_call.1} parent=1 // pred_region
      %45 = vst [vmem:[#allocation2] sm:$0xff] 0.0
    $region25: #{tpu_custom_call.1} parent=1 // pred_fallthru
      _
    %s46 = smul.u32 0, 8
    %s47 = scalar_lea.vmem [#allocation3], %s46
    %v48 = vld [vmem:[%s47] sm:$0xff]
    %v49 = vld [vmem:[#allocation2] sm:$0xff]
    %v50 = vld [vmem:[#allocation6] sm:$0xff]
    %v51 = vld [vmem:[#allocation6 + $0x8] sm:$0xff]
    %v52 = vld [vmem:[#allocation6 + $0x10] sm:$0xff]
    %v53 = vld [vmem:[#allocation6 + $0x18] sm:$0xff]
    %v54 = vld [vmem:[#allocation6 + $0x20] sm:$0xff]
    %v55 = vld [vmem:[#allocation6 + $0x28] sm:$0xff]
    %v56 = vld [vmem:[#allocation6 + $0x30] sm:$0xff]
    %v57 = vld [vmem:[#allocation6 + $0x38] sm:$0xff]
    %v58 = vld [vmem:[#allocation6 + $0x40] sm:$0xff]
    %v59 = vld [vmem:[#allocation6 + $0x48] sm:$0xff]
    %v60 = vld [vmem:[#allocation6 + $0x50] sm:$0xff]
    %v61 = vld [vmem:[#allocation6 + $0x58] sm:$0xff]
    %v62 = vld [vmem:[#allocation6 + $0x60] sm:$0xff]
    %v63 = vld [vmem:[#allocation6 + $0x68] sm:$0xff]
    %v64 = vld [vmem:[#allocation6 + $0x70] sm:$0xff]
    %v65 = vld [vmem:[#allocation6 + $0x78] sm:$0xff]
    %66 = vmatprep.subr.mxu0 0.0
    %67 = vmatpush1.xpose.msra.mxu0 %v50
    %68 = vmatprep.subr.mxu0 0.0
    %69 = vmatpush1.xpose.msra.mxu0 %v51
    %70 = vmatprep.subr.mxu0 0.0
    %71 = vmatpush1.xpose.msra.mxu0 %v52
    %72 = vmatprep.subr.mxu0 0.0
    %73 = vmatpush1.xpose.msra.mxu0 %v53
    %74 = vmatprep.subr.mxu0 0.0
    %75 = vmatpush1.xpose.msra.mxu0 %v54
    %76 = vmatprep.subr.mxu0 0.0
    %77 = vmatpush1.xpose.msra.mxu0 %v55
    %78 = vmatprep.subr.mxu0 0.0
    %79 = vmatpush1.xpose.msra.mxu0 %v56
    %80 = vmatprep.subr.mxu0 0.0
    %81 = vmatpush1.xpose.msra.mxu0 %v57
    %82 = vmatprep.subr.mxu0 0.0
    %83 = vmatpush1.xpose.msra.mxu0 %v58
    %84 = vmatprep.subr.mxu0 0.0
    %85 = vmatpush1.xpose.msra.mxu0 %v59
    %86 = vmatprep.subr.mxu0 0.0
    %87 = vmatpush1.xpose.msra.mxu0 %v60
    %88 = vmatprep.subr.mxu0 0.0
    %89 = vmatpush1.xpose.msra.mxu0 %v61
    %90 = vmatprep.subr.mxu0 0.0
    %91 = vmatpush1.xpose.msra.mxu0 %v62
    %92 = vmatprep.subr.mxu0 0.0
    %93 = vmatpush1.xpose.msra.mxu0 %v63
    %94 = vmatprep.subr.mxu0 0.0
    %95 = vmatpush1.xpose.msra.mxu0 %v64
    %96 = vmatprep.subr.mxu0 0.0
    %97 = vmatpush1.xpose.msra.mxu0 %v65
    %98 = vmatprep.subr.mxu0 0.0
    %99 = vmatpush1.xpose.msra.mxu0 0.0
    %100 = vmatprep.subr.mxu0 0.0
    %101 = vmatpush1.xpose.msra.mxu0 0.0
    %102 = vmatprep.subr.mxu0 0.0
    %103 = vmatpush1.xpose.msra.mxu0 0.0
    %104 = vmatprep.subr.mxu0 0.0
    %105 = vmatpush1.xpose.msra.mxu0 0.0
    %106 = vmatprep.subr.mxu0 0.0
    %107 = vmatpush1.xpose.msra.mxu0 0.0
    %108 = vmatprep.subr.mxu0 0.0
    %109 = vmatpush1.xpose.msra.mxu0 0.0
    %110 = vmatprep.subr.mxu0 0.0
    %111 = vmatpush1.xpose.msra.mxu0 0.0
    %112 = vmatprep.subr.mxu0 0.0
    %113 = vmatpush1.xpose.msra.mxu0 0.0
    %114 = vmatprep.subr.mxu0 0.0
    %115 = vmatpush1.xpose.msra.mxu0 0.0
    %116 = vmatprep.subr.mxu0 0.0
    %117 = vmatpush1.xpose.msra.mxu0 0.0
    %118 = vmatprep.subr.mxu0 0.0
    %119 = vmatpush1.xpose.msra.mxu0 0.0
    %120 = vmatprep.subr.mxu0 0.0
    %121 = vmatpush1.xpose.msra.mxu0 0.0
    %122 = vmatprep.subr.mxu0 0.0
    %123 = vmatpush1.xpose.msra.mxu0 0.0
    %124 = vmatprep.subr.mxu0 0.0
    %125 = vmatpush1.xpose.msra.mxu0 0.0
    %126 = vmatprep.subr.mxu0 0.0
    %127 = vmatpush1.xpose.msra.mxu0 0.0
    %128 = vmatprep.subr.mxu0 0.0
    %129 = vmatpush1.xpose.msra.mxu0 0.0
    %130 = vmatprep.mubr.f32.mxu0 0.0
    %131 = vmatmul.mubr.f32.gmra.mrb[0].mxu0 %v48
    %v132 = vpop.f32.mrb[0].mxu0
    %v133 = vadd.f32 0.0, %v132
    %v134 = vpop.f32.mrb[0].mxu0
    %135 = vdwg.mxu0
    %v136 = vadd.f32 %v49, %v133
    %137 = vst [vmem:[#allocation2] sm:$0xff] %v136
    // Predicated region
    $region26: #{tpu_custom_call.1} parent=1 // pred_check
      %p138 = pneg %p41
    $region27: #{tpu_custom_call.1} parent=1 // pred_check_branch
      %140 = sbr.rel (%p138) target = $region29
    $region28: #{tpu_custom_call.1} parent=1 // pred_region
      %v141 = vld [vmem:[#allocation2] sm:$0xff]
      %v142 = vld [vmem:[%s2] sm:$0x1]
      %v144 = vlaneseq
      %v145 = vshrl.u32 %v144, 7
      %v146 = vsub.s32 0, %v145
      %v147 = vrot.slane %v142, %v146
      %v149 = vadd.f32 %v141, %v147
      %150 = vst [vmem:[#allocation8] sm:$0xff] %v149
    $region29: #{tpu_custom_call.1} parent=1 // pred_fallthru
      _
    // Predicated region
    $region30: #{tpu_custom_call.1} parent=1 // pred_check
      _
    $region31: #{tpu_custom_call.1} parent=1 // pred_check_branch
      %152 = sbr.rel (0) target = $region33
    $region32: #{tpu_custom_call.1} parent=1 // pred_region
      %s154 = ssub.s32 128, 128
      %155 = vsyncadd [#allocation5], %s154
      %s157 = sshll.u32 [#allocation8], 4
      %s158 = int_to_ptr.vmem [resolvable:$true] %s157
      %160 = dma.vmem_to_hbm [thread:$0]  %s158, 128, %s3, [#allocation5]
    $region33: #{tpu_custom_call.1} parent=1 // pred_fallthru
      _
    // Predicated region
    $region34: #{tpu_custom_call.1} parent=1 // pred_check
      _
    $region35: #{tpu_custom_call.1} parent=1 // pred_check_branch
      %162 = sbr.rel (0) target = $region37
    $region36: #{tpu_custom_call.1} parent=1 // pred_region
      %163 = dma.done [#allocation5], 128
    $region37: #{tpu_custom_call.1} parent=1 // pred_fallthru
      _
    %164 = vsyncpa [#allocation4], 1
    %165 = vsyncpa [#allocation7], 1
    %166 = vsyncpa [#allocation5], 1

</llo_original>
